<compile_context>
chip_gen: v6e
topology: v6e:2x2x1
jax: 0.10.0
libtpu: 0.0.40
codegen_flags: <defaults>
</compile_context>

<pallas_src>
import functools

import jax
import jax.numpy as jnp
import numpy as np
from jax.experimental import pallas as pl
from jax.experimental.pallas import tpu as pltpu


def _channel_attention_kernel(x_ref,
                              w1a_ref, w1b_ref, b1_ref,
                              w2a_ref, w2b_ref, w2c_ref, b2_ref,
                              w3_ref, b3_ref,
                              o_ref,
                              sum_ref, max_ref,
                              *, hw, thw, need_mask):
    k = pl.program_id(1)
    last = pl.num_programs(1) - 1

    @pl.when(k == 0)
    def _init():
        sum_ref[...] = jnp.zeros_like(sum_ref)
        max_ref[...] = jnp.full_like(max_ref, -jnp.inf)

    # x tile: (1, C, THW) -> (C, THW), kept in its native dtype.
    x = x_ref[0]

    def _accumulate(x_sum, x_max):
        # Per-channel spatial sum / max: plain lane reduces (VPU/XLU), f32 accumulation.
        sum_ref[...] += jnp.sum(x_sum, axis=-1, keepdims=True, dtype=jnp.float32)
        tile_max = jnp.max(x_max, axis=-1, keepdims=True).astype(jnp.float32)
        max_ref[...] = jnp.maximum(max_ref[...], tile_max)

    if need_mask:
        # Only the last (ragged) tile pays for the mask; full tiles go unmasked.
        @pl.when(k != last)
        def _full_tile():
            _accumulate(x, x)

        @pl.when(k == last)
        def _ragged_tile():
            lane = jax.lax.broadcasted_iota(jnp.int32, x.shape, 1)
            valid = (k * thw + lane) < hw
            # NOTE: -inf mask assumes a float dtype with an inf encoding (f32/bf16).
            _accumulate(jnp.where(valid, x, jnp.zeros_like(x)),
                        jnp.where(valid, x, jnp.full_like(x, -jnp.inf)))
    else:
        _accumulate(x, x)

    @pl.when(k == last)
    def _finalize():
        avg = sum_ref[...] * (1.0 / hw)            # (C, 1) f32 column
        mx = max_ref[...]                          # (C, 1) f32 column

        dot = lambda w_ref, v: jnp.dot(w_ref[...], v,
                                       preferred_element_type=jnp.float32)

        # conv1x1 on cat([avg, max]) as split column-form matmuls (no concat).
        mid1 = dot(w1a_ref, avg) + dot(w1b_ref, mx) + b1_ref[...]                 # (C, 1)
        # conv1x1_2 on cat([avg, max, mid1])
        mid2 = (dot(w2a_ref, avg) + dot(w2b_ref, mx)
                + dot(w2c_ref, mid1) + b2_ref[...])                               # (C//2, 1)
        # conv1x1_3
        mid3 = dot(w3_ref, mid2) + b3_ref[...]                                    # (C, 1)

        # Softmax over channels (sublane axis of the (C,1) column).
        m = jnp.max(mid3, axis=0, keepdims=True)
        e = jnp.exp(mid3 - m)
        soft = e / jnp.sum(e, axis=0, keepdims=True)

        # torch.matmul of (..., 1, 1) x (..., 1, 1) is an elementwise product.
        o_ref[0] = (soft * avg + mx).astype(o_ref.dtype)                          # (C, 1)


def channel_attention(x, params, spatial_tile=None):
    """x: (N, C, H, W) float; params: (w1,b1,w2,b2,w3,b3) with 1x1 conv kernels squeezed to 2D."""
    N, C, H, W = x.shape
    HW = H * W
    w1, b1, w2, b2, w3, b3 = params          # w1:(C,2C) w2:(C//2,3C) w3:(C,C//2)

    # Split the concat-consuming 1x1-conv weights; keep them UN-transposed for
    # the column-form tail (mid = W @ col).
    w1a, w1b = w1[:, :C], w1[:, C:]                      # (C, C), (C, C)
    w2a, w2b, w2c = w2[:, :C], w2[:, C:2 * C], w2[:, 2 * C:]   # (C//2, C) x3
    b1_c = b1.reshape(C, 1)
    b2_c = b2.reshape(C // 2, 1)
    b3_c = b3.reshape(C, 1)

    x2 = x.reshape(N, C, HW)

    # Spatial tile: multiple of 128 lanes (or the full HW).  ~4 MiB per buffer
    # so double-buffered tiles + weights fit every generation (incl. v7x 64 MiB
    # physical VMEM) while keeping per-grid-step overhead small.
    itemsize = jnp.dtype(x.dtype).itemsize
    if spatial_tile is None:
        target_bytes = 4 * 1024 * 1024
        max_thw = max(128, (target_bytes // max(1, C * itemsize)) // 128 * 128)
    else:
        # Clamp/round caller hint to a legal lane width (multiple of 128).
        max_thw = max(128, (int(spatial_tile) // 128) * 128)
    thw = HW if HW <= max_thw else max_thw
    kt = pl.cdiv(HW, thw)
    need_mask = (HW % thw) != 0

    kernel = functools.partial(_channel_attention_kernel,
                               hw=HW, thw=thw, need_mask=need_mask)

    def wspec(shape):
        nd = len(shape)
        return pl.BlockSpec(shape, lambda n, k, _nd=nd: (0,) * _nd)

    out = pl.pallas_call(
        kernel,
        out_shape=jax.ShapeDtypeStruct((N, C, 1), x.dtype),
        grid_spec=pltpu.PrefetchScalarGridSpec(
            num_scalar_prefetch=0,
            grid=(N, kt),
            in_specs=[
                pl.BlockSpec((1, C, thw), lambda n, k: (n, 0, k)),
                wspec((C, C)), wspec((C, C)), wspec((C, 1)),
                wspec((C // 2, C)), wspec((C // 2, C)), wspec((C // 2, C)), wspec((C // 2, 1)),
                wspec((C, C // 2)), wspec((C, 1)),
            ],
            out_specs=pl.BlockSpec((1, C, 1), lambda n, k: (n, 0, 0)),
            scratch_shapes=[pltpu.VMEM((C, 1), jnp.float32),    # running spatial sum
                            pltpu.VMEM((C, 1), jnp.float32)],   # running spatial max
        ),
        compiler_params=pltpu.CompilerParams(
            dimension_semantics=("parallel", "arbitrary"),
            vmem_limit_bytes=48 * 1024 * 1024,
        ),
    )(x2, w1a, w1b, b1_c, w2a, w2b, w2c, b2_c, w3, b3_c)

    return out.reshape(N, C, 1, 1)


def channel_attention_ref(x, params):
    """Pure-JAX reference matching the PyTorch forward."""
    w1, b1, w2, b2, w3, b3 = params
    avg = jnp.mean(x, axis=(2, 3))            # (N, C)
    mx = jnp.max(x, axis=(2, 3))              # (N, C)
    mid = jnp.concatenate([avg, mx], axis=1) @ w1.T + b1
    mid = jnp.concatenate([avg, mx, mid], axis=1) @ w2.T + b2
    mid = mid @ w3.T + b3
    soft = jax.nn.softmax(mid, axis=1)
    out = soft * avg + mx
    return out[..., None, None]


def init_params(key, channels):
    """Deterministic PyTorch-Conv2d-style init; 1x1 conv kernels stored as 2D matrices."""
    ks = jax.random.split(key, 6)

    def conv_init(kw, kb, out_c, in_c):
        bound = 1.0 / np.sqrt(in_c)
        w = jax.random.uniform(kw, (out_c, in_c), jnp.float32, -bound, bound)
        b = jax.random.uniform(kb, (out_c,), jnp.float32, -bound, bound)
        return w, b

    w1, b1 = conv_init(ks[0], ks[1], channels, channels * 2)
    w2, b2 = conv_init(ks[2], ks[3], channels // 2, channels * 3)
    w3, b3 = conv_init(ks[4], ks[5], channels, channels // 2)
    return w1, b1, w2, b2, w3, b3


if __name__ == "__main__":
    key = jax.random.PRNGKey(0)
    kx, kx2, kp = jax.random.split(key, 3)

    N, C, H, W = 2, 4, 16, 16
    x = jax.random.normal(kx, (N, C, H, W), jnp.float32)
    params = init_params(kp, C)

    ref = channel_attention_ref(x, params)

    # Default tiling (single spatial tile at this small size).
    out = jax.block_until_ready(channel_attention(x, params))
    np.testing.assert_allclose(np.asarray(out), np.asarray(ref), rtol=1e-5, atol=1e-5)
    assert out.shape == (N, C, 1, 1)

    # Multiple exact spatial tiles (HW=256 -> two 128-lane tiles): exercises the
    # cross-tile sum/max accumulation and init/finalize paths, unmasked.
    out_tiled = jax.block_until_ready(channel_attention(x, params, spatial_tile=128))
    np.testing.assert_allclose(np.asarray(out_tiled), np.asarray(ref), rtol=1e-5, atol=1e-5)

    # Ragged last tile (HW=169 -> 128 + 41): exercises the masked-last-tile path.
    xr = jax.random.normal(kx2, (N, C, 13, 13), jnp.float32)
    ref_r = channel_attention_ref(xr, params)
    out_r = jax.block_until_ready(channel_attention(xr, params, spatial_tile=128))
    np.testing.assert_allclose(np.asarray(out_r), np.asarray(ref_r), rtol=1e-5, atol=1e-5)

    print("KERNEL_OK")
</pallas_src>

<mosaic_0001>
module attributes {stable_mosaic.version = 11 : i64} {
  func.func @_channel_attention_kernel(%arg0: i32, %arg1: i32, %arg2: memref<1x4x256xf32, #tpu.memory_space<vmem>>, %arg3: memref<4x4xf32, #tpu.memory_space<vmem>>, %arg4: memref<4x4xf32, #tpu.memory_space<vmem>>, %arg5: memref<4x1xf32, #tpu.memory_space<vmem>>, %arg6: memref<2x4xf32, #tpu.memory_space<vmem>>, %arg7: memref<2x4xf32, #tpu.memory_space<vmem>>, %arg8: memref<2x4xf32, #tpu.memory_space<vmem>>, %arg9: memref<2x1xf32, #tpu.memory_space<vmem>>, %arg10: memref<4x2xf32, #tpu.memory_space<vmem>>, %arg11: memref<4x1xf32, #tpu.memory_space<vmem>>, %arg12: memref<1x4x1xf32, #tpu.memory_space<vmem>>, %arg13: memref<4x1xf32, #tpu.memory_space<vmem>>, %arg14: memref<4x1xf32, #tpu.memory_space<vmem>>) attributes {dimension_semantics = [#tpu.dimension_semantics<parallel>, #tpu.dimension_semantics<arbitrary>], iteration_bounds = array<i64: 2, 1>, scalar_prefetch = 0 : i64, scratch_operands = 2 : i64, tpu.core_type = #tpu.core_type<tc>, window_params = [{transform_indices = @transform_0, window_bounds = array<i64: 1, 4, 256>}, {pipeline_mode = #tpu.pipeline_mode<synchronous>, transform_indices = @transform_1, window_bounds = array<i64: 4, 4>}, {pipeline_mode = #tpu.pipeline_mode<synchronous>, transform_indices = @transform_2, window_bounds = array<i64: 4, 4>}, {pipeline_mode = #tpu.pipeline_mode<synchronous>, transform_indices = @transform_3, window_bounds = array<i64: 4, 1>}, {pipeline_mode = #tpu.pipeline_mode<synchronous>, transform_indices = @transform_4, window_bounds = array<i64: 2, 4>}, {pipeline_mode = #tpu.pipeline_mode<synchronous>, transform_indices = @transform_5, window_bounds = array<i64: 2, 4>}, {pipeline_mode = #tpu.pipeline_mode<synchronous>, transform_indices = @transform_6, window_bounds = array<i64: 2, 4>}, {pipeline_mode = #tpu.pipeline_mode<synchronous>, transform_indices = @transform_7, window_bounds = array<i64: 2, 1>}, {pipeline_mode = #tpu.pipeline_mode<synchronous>, transform_indices = @transform_8, window_bounds = array<i64: 4, 2>}, {pipeline_mode = #tpu.pipeline_mode<synchronous>, transform_indices = @transform_9, window_bounds = array<i64: 4, 1>}, {transform_indices = @transform_10, window_bounds = array<i64: 1, 4, 1>}]} {
    %c0_i32 = arith.constant 0 : i32
    %0 = arith.cmpi eq, %arg1, %c0_i32 : i32
    %1 = arith.extui %0 : i1 to i32
    %c0_i32_0 = arith.constant 0 : i32
    %2 = arith.cmpi ne, %1, %c0_i32_0 : i32
    scf.if %2 {
      %cst_14 = arith.constant 0.000000e+00 : f32
      %18 = vector.broadcast %cst_14 : f32 to vector<4x1xf32>
      %c0_15 = arith.constant 0 : index
      %c0_16 = arith.constant 0 : index
      %19 = vector.load %arg13[%c0_15, %c0_16] : memref<4x1xf32, #tpu.memory_space<vmem>>, vector<4x1xf32>
      tpu.vector_store %arg13[%c0_15, %c0_16], %18 {strides = array<i32>} : memref<4x1xf32, #tpu.memory_space<vmem>>, vector<4x1xf32>,
      %cst_17 = arith.constant 0xFF800000 : f32
      %20 = vector.broadcast %cst_17 : f32 to vector<4x1xf32>
      %c0_18 = arith.constant 0 : index
      %c0_19 = arith.constant 0 : index
      %21 = vector.load %arg14[%c0_18, %c0_19] : memref<4x1xf32, #tpu.memory_space<vmem>>, vector<4x1xf32>
      tpu.vector_store %arg14[%c0_18, %c0_19], %20 {strides = array<i32>} : memref<4x1xf32, #tpu.memory_space<vmem>>, vector<4x1xf32>,
    } else {
    }
    %c0 = arith.constant 0 : index
    %c0_1 = arith.constant 0 : index
    %c0_2 = arith.constant 0 : index
    %3 = vector.load %arg2[%c0, %c0_1, %c0_2] : memref<1x4x256xf32, #tpu.memory_space<vmem>>, vector<1x4x256xf32>
    %4 = vector.shape_cast %3 : vector<1x4x256xf32> to vector<4x256xf32>
    %c0_3 = arith.constant 0 : index
    %c0_4 = arith.constant 0 : index
    %5 = vector.load %arg13[%c0_3, %c0_4] : memref<4x1xf32, #tpu.memory_space<vmem>>, vector<4x1xf32>
    %cst = arith.constant dense<0.000000e+00> : vector<4xf32>
    %6 = vector.multi_reduction <add>, %4, %cst [1] : vector<4x256xf32> to vector<4xf32>
    %7 = vector.shape_cast %6 : vector<4xf32> to vector<4x1xf32>
    %8 = arith.addf %5, %7 : vector<4x1xf32>
    %c0_5 = arith.constant 0 : index
    %c0_6 = arith.constant 0 : index
    %9 = vector.load %arg13[%c0_5, %c0_6] : memref<4x1xf32, #tpu.memory_space<vmem>>, vector<4x1xf32>
    tpu.vector_store %arg13[%c0_5, %c0_6], %8 {strides = array<i32>} : memref<4x1xf32, #tpu.memory_space<vmem>>, vector<4x1xf32>,
    %cst_7 = arith.constant dense<0xFF800000> : vector<4xf32>
    %10 = vector.multi_reduction <maximumf>, %4, %cst_7 [1] : vector<4x256xf32> to vector<4xf32>
    %11 = vector.shape_cast %10 : vector<4xf32> to vector<4x1xf32>
    %c0_8 = arith.constant 0 : index
    %c0_9 = arith.constant 0 : index
    %12 = vector.load %arg14[%c0_8, %c0_9] : memref<4x1xf32, #tpu.memory_space<vmem>>, vector<4x1xf32>
    %13 = arith.maximumf %12, %11 : vector<4x1xf32>
    %c0_10 = arith.constant 0 : index
    %c0_11 = arith.constant 0 : index
    %14 = vector.load %arg14[%c0_10, %c0_11] : memref<4x1xf32, #tpu.memory_space<vmem>>, vector<4x1xf32>
    tpu.vector_store %arg14[%c0_10, %c0_11], %13 {strides = array<i32>} : memref<4x1xf32, #tpu.memory_space<vmem>>, vector<4x1xf32>,
    %c0_i32_12 = arith.constant 0 : i32
    %15 = arith.cmpi eq, %arg1, %c0_i32_12 : i32
    %16 = arith.extui %15 : i1 to i32
    %c0_i32_13 = arith.constant 0 : i32
    %17 = arith.cmpi ne, %16, %c0_i32_13 : i32
    scf.if %17 {
      %c0_14 = arith.constant 0 : index
      %c0_15 = arith.constant 0 : index
      %18 = vector.load %arg13[%c0_14, %c0_15] : memref<4x1xf32, #tpu.memory_space<vmem>>, vector<4x1xf32>
      %cst_16 = arith.constant 3.906250e-03 : f32
      %19 = vector.broadcast %cst_16 : f32 to vector<4x1xf32>
      %20 = arith.mulf %18, %19 : vector<4x1xf32>
      %c0_17 = arith.constant 0 : index
      %c0_18 = arith.constant 0 : index
      %21 = vector.load %arg14[%c0_17, %c0_18] : memref<4x1xf32, #tpu.memory_space<vmem>>, vector<4x1xf32>
      %c0_19 = arith.constant 0 : index
      %c0_20 = arith.constant 0 : index
      %22 = vector.load %arg3[%c0_19, %c0_20] : memref<4x4xf32, #tpu.memory_space<vmem>>, vector<4x4xf32>
      %cst_21 = arith.constant dense<0.000000e+00> : vector<4x1xf32>
      %23 = tpu.matmul %22, %20, %cst_21 {dimension_numbers = #tpu.dot_dimension_numbers<[1], [0], [0], [1], [0, 0, 1, 1], [], []>} : vector<4x4xf32>, vector<4x1xf32>, vector<4x1xf32> -> vector<4x1xf32>
      %c0_22 = arith.constant 0 : index
      %c0_23 = arith.constant 0 : index
      %24 = vector.load %arg4[%c0_22, %c0_23] : memref<4x4xf32, #tpu.memory_space<vmem>>, vector<4x4xf32>
      %cst_24 = arith.constant dense<0.000000e+00> : vector<4x1xf32>
      %25 = tpu.matmul %24, %21, %cst_24 {dimension_numbers = #tpu.dot_dimension_numbers<[1], [0], [0], [1], [0, 0, 1, 1], [], []>} : vector<4x4xf32>, vector<4x1xf32>, vector<4x1xf32> -> vector<4x1xf32>
      %26 = arith.addf %23, %25 : vector<4x1xf32>
      %c0_25 = arith.constant 0 : index
      %c0_26 = arith.constant 0 : index
      %27 = vector.load %arg5[%c0_25, %c0_26] : memref<4x1xf32, #tpu.memory_space<vmem>>, vector<4x1xf32>
      %28 = arith.addf %26, %27 : vector<4x1xf32>
      %c0_27 = arith.constant 0 : index
      %c0_28 = arith.constant 0 : index
      %29 = vector.load %arg6[%c0_27, %c0_28] : memref<2x4xf32, #tpu.memory_space<vmem>>, vector<2x4xf32>
      %cst_29 = arith.constant dense<0.000000e+00> : vector<2x1xf32>
      %30 = tpu.matmul %29, %20, %cst_29 {dimension_numbers = #tpu.dot_dimension_numbers<[1], [0], [0], [1], [0, 0, 1, 1], [], []>} : vector<2x4xf32>, vector<4x1xf32>, vector<2x1xf32> -> vector<2x1xf32>
      %c0_30 = arith.constant 0 : index
      %c0_31 = arith.constant 0 : index
      %31 = vector.load %arg7[%c0_30, %c0_31] : memref<2x4xf32, #tpu.memory_space<vmem>>, vector<2x4xf32>
      %cst_32 = arith.constant dense<0.000000e+00> : vector<2x1xf32>
      %32 = tpu.matmul %31, %21, %cst_32 {dimension_numbers = #tpu.dot_dimension_numbers<[1], [0], [0], [1], [0, 0, 1, 1], [], []>} : vector<2x4xf32>, vector<4x1xf32>, vector<2x1xf32> -> vector<2x1xf32>
      %33 = arith.addf %30, %32 : vector<2x1xf32>
      %c0_33 = arith.constant 0 : index
      %c0_34 = arith.constant 0 : index
      %34 = vector.load %arg8[%c0_33, %c0_34] : memref<2x4xf32, #tpu.memory_space<vmem>>, vector<2x4xf32>
      %cst_35 = arith.constant dense<0.000000e+00> : vector<2x1xf32>
      %35 = tpu.matmul %34, %28, %cst_35 {dimension_numbers = #tpu.dot_dimension_numbers<[1], [0], [0], [1], [0, 0, 1, 1], [], []>} : vector<2x4xf32>, vector<4x1xf32>, vector<2x1xf32> -> vector<2x1xf32>
      %36 = arith.addf %33, %35 : vector<2x1xf32>
      %c0_36 = arith.constant 0 : index
      %c0_37 = arith.constant 0 : index
      %37 = vector.load %arg9[%c0_36, %c0_37] : memref<2x1xf32, #tpu.memory_space<vmem>>, vector<2x1xf32>
      %38 = arith.addf %36, %37 : vector<2x1xf32>
      %c0_38 = arith.constant 0 : index
      %c0_39 = arith.constant 0 : index
      %39 = vector.load %arg10[%c0_38, %c0_39] : memref<4x2xf32, #tpu.memory_space<vmem>>, vector<4x2xf32>
      %cst_40 = arith.constant dense<0.000000e+00> : vector<4x1xf32>
      %40 = tpu.matmul %39, %38, %cst_40 {dimension_numbers = #tpu.dot_dimension_numbers<[1], [0], [0], [1], [0, 0, 1, 1], [], []>} : vector<4x2xf32>, vector<2x1xf32>, vector<4x1xf32> -> vector<4x1xf32>
      %c0_41 = arith.constant 0 : index
      %c0_42 = arith.constant 0 : index
      %41 = vector.load %arg11[%c0_41, %c0_42] : memref<4x1xf32, #tpu.memory_space<vmem>>, vector<4x1xf32>
      %42 = arith.addf %40, %41 : vector<4x1xf32>
      %cst_43 = arith.constant dense<0xFF800000> : vector<1xf32>
      %43 = vector.multi_reduction <maximumf>, %42, %cst_43 [0] : vector<4x1xf32> to vector<1xf32>
      %44 = vector.shape_cast %43 : vector<1xf32> to vector<1x1xf32>
      %45 = vector.broadcast %44 : vector<1x1xf32> to vector<4x1xf32>
      %46 = arith.subf %42, %45 : vector<4x1xf32>
      %47 = math.exp %46 : vector<4x1xf32>
      %cst_44 = arith.constant dense<0.000000e+00> : vector<1xf32>
      %48 = vector.multi_reduction <add>, %47, %cst_44 [0] : vector<4x1xf32> to vector<1xf32>
      %49 = vector.shape_cast %48 : vector<1xf32> to vector<1x1xf32>
      %50 = vector.broadcast %49 : vector<1x1xf32> to vector<4x1xf32>
      %51 = arith.divf %47, %50 : vector<4x1xf32>
      %52 = arith.mulf %51, %20 : vector<4x1xf32>
      %53 = arith.addf %52, %21 : vector<4x1xf32>
      %c0_45 = arith.constant 0 : index
      %c0_46 = arith.constant 0 : index
      %c0_47 = arith.constant 0 : index
      %54 = vector.load %arg12[%c0_45, %c0_46, %c0_47] : memref<1x4x1xf32, #tpu.memory_space<vmem>>, vector<1x4x1xf32>
      %55 = vector.shape_cast %54 : vector<1x4x1xf32> to vector<4x1xf32>
      %56 = vector.shape_cast %53 : vector<4x1xf32> to vector<1x4x1xf32>
      tpu.vector_store %arg12[%c0_45, %c0_46, %c0_47], %56 {strides = array<i32>} : memref<1x4x1xf32, #tpu.memory_space<vmem>>, vector<1x4x1xf32>,
    } else {
    }
    return
  }
  func.func @transform_0(%arg0: i32, %arg1: i32) -> (i32, i32, i32) {
    %c0_i32 = arith.constant 0 : i32
    %c0_i32_0 = arith.constant 0 : i32
    return %arg0, %c0_i32, %arg1 : i32, i32, i32
  }
  func.func @transform_1(%arg0: i32, %arg1: i32) -> (i32, i32) {
    %c0_i32 = arith.constant 0 : i32
    %c0_i32_0 = arith.constant 0 : i32
    %c0_i32_1 = arith.constant 0 : i32
    return %c0_i32, %c0_i32_0 : i32, i32
  }
  func.func @transform_2(%arg0: i32, %arg1: i32) -> (i32, i32) {
    %c0_i32 = arith.constant 0 : i32
    %c0_i32_0 = arith.constant 0 : i32
    %c0_i32_1 = arith.constant 0 : i32
    return %c0_i32, %c0_i32_0 : i32, i32
  }
  func.func @transform_3(%arg0: i32, %arg1: i32) -> (i32, i32) {
    %c0_i32 = arith.constant 0 : i32
    %c0_i32_0 = arith.constant 0 : i32
    %c0_i32_1 = arith.constant 0 : i32
    return %c0_i32, %c0_i32_0 : i32, i32
  }
  func.func @transform_4(%arg0: i32, %arg1: i32) -> (i32, i32) {
    %c0_i32 = arith.constant 0 : i32
    %c0_i32_0 = arith.constant 0 : i32
    %c0_i32_1 = arith.constant 0 : i32
    return %c0_i32, %c0_i32_0 : i32, i32
  }
  func.func @transform_5(%arg0: i32, %arg1: i32) -> (i32, i32) {
    %c0_i32 = arith.constant 0 : i32
    %c0_i32_0 = arith.constant 0 : i32
    %c0_i32_1 = arith.constant 0 : i32
    return %c0_i32, %c0_i32_0 : i32, i32
  }
  func.func @transform_6(%arg0: i32, %arg1: i32) -> (i32, i32) {
    %c0_i32 = arith.constant 0 : i32
    %c0_i32_0 = arith.constant 0 : i32
    %c0_i32_1 = arith.constant 0 : i32
    return %c0_i32, %c0_i32_0 : i32, i32
  }
  func.func @transform_7(%arg0: i32, %arg1: i32) -> (i32, i32) {
    %c0_i32 = arith.constant 0 : i32
    %c0_i32_0 = arith.constant 0 : i32
    %c0_i32_1 = arith.constant 0 : i32
    return %c0_i32, %c0_i32_0 : i32, i32
  }
  func.func @transform_8(%arg0: i32, %arg1: i32) -> (i32, i32) {
    %c0_i32 = arith.constant 0 : i32
    %c0_i32_0 = arith.constant 0 : i32
    %c0_i32_1 = arith.constant 0 : i32
    return %c0_i32, %c0_i32_0 : i32, i32
  }
  func.func @transform_9(%arg0: i32, %arg1: i32) -> (i32, i32) {
    %c0_i32 = arith.constant 0 : i32
    %c0_i32_0 = arith.constant 0 : i32
    %c0_i32_1 = arith.constant 0 : i32
    return %c0_i32, %c0_i32_0 : i32, i32
  }
  func.func @transform_10(%arg0: i32, %arg1: i32) -> (i32, i32, i32) {
    %c0_i32 = arith.constant 0 : i32
    %c0_i32_0 = arith.constant 0 : i32
    %c0_i32_1 = arith.constant 0 : i32
    return %arg0, %c0_i32, %c0_i32_0 : i32, i32, i32
  }
}

</mosaic_0001>

<llo_original>
// kernel: tpu_custom_call.1
$region0: #{tpu_custom_call.1}
  #allocation0 [shape = 'u32[]', space=smem, size = 0x4, offset = 0x4, fixed_abs, tag = 'smem constant byte address 0x4 - core index']
  #allocation1 [shape = 'u32[144,128]{1,0:T(1,128)}', space=vmem, size = 0x12000, scoped, tag = 'internal scratch']
  #allocation2 [shape = 'f32[4,1]{1,0:T(4,128)}', space=vmem, size = 0x800, scoped, tag = 'scratch operand']
  #allocation3 [shape = 'f32[4,1]{1,0:T(4,128)}', space=vmem, size = 0x800, scoped, tag = 'scratch operand']
  %s0 = inlined_call_operand.vmem [shape: f32[2,4,256], index: 0, kind: input, shape index: {}]
  %s1 = inlined_call_operand.vmem [shape: f32[4,4], index: 1, kind: input, shape index: {}]
  %s2 = inlined_call_operand.hbm [shape: f32[4,4], index: 2, kind: input, shape index: {}]
  %s3 = inlined_call_operand.vmem [shape: f32[4,1], index: 3, kind: input, shape index: {}]
  %s4 = inlined_call_operand.vmem [shape: f32[2,4], index: 4, kind: input, shape index: {}]
  %s5 = inlined_call_operand.vmem [shape: f32[2,4], index: 5, kind: input, shape index: {}]
  %s6 = inlined_call_operand.vmem [shape: f32[2,4], index: 6, kind: input, shape index: {}]
  %s7 = inlined_call_operand.vmem [shape: f32[2,1], index: 7, kind: input, shape index: {}]
  %s8 = inlined_call_operand.vmem [shape: f32[4,2], index: 8, kind: input, shape index: {}]
  %s9 = inlined_call_operand.vmem [shape: f32[4,1], index: 9, kind: input, shape index: {}]
  %s10 = inlined_call_operand.vmem [shape: f32[2,4,1], index: 10, kind: output, shape index: {}]
  %s11 = sld [smem:[#allocation0]]
  $region85: #{tpu_custom_call.1} parent=0
    _
  %s13 = ssub.s32 1, %s11
  %s14 = scalar_select 0, %s13, %s11
  $region1: #{tpu_custom_call.1} parent=0
    #allocation4 [shape = 'u8[2048]{0}', space=vmem, size = 0x800, scoped, tag = 'input window, operand 2, single buffered']
    #allocation5 [shape = 's32[2]{0}', space=sflag, size = 0x8, scoped, tag = 'scoped memory for tpu_custom_call.1']
    %15 = vsyncpa [#allocation5], 0
    loop: start=0, step=1, limit=4
    $region2: #{tpu_custom_call.1} parent=1 // loop_pre_header
      _
    $region3: #{tpu_custom_call.1} parent=1 // loop_header
      %s17 = sphi 0, %s21
      %p18 = scmp.ge.s32.totalorder %s17, 4
      %s24 = sphi 0, %s36
      %s25 = sphi 0, %s32
      %s26 = sphi 0, %s24
      %s27 = sphi 0, %s25
      %s28 = sphi 0, %s26
      %s29 = sphi 0, %s27
      %s41 = sphi 0, %s43
      %s44 = sphi 0, %s41
      %s45 = sphi 0, %s44
      %s61 = sphi 0, %s45
      %s65 = sphi 0, %s65
      %s67 = sphi 0, %s65
      %s68 = sphi 0, %s67
      %s82 = sphi 0, %s68
      %s86 = sphi 0, %s86
      %s88 = sphi 0, %s86
      %s89 = sphi 0, %s88
      %s103 = sphi 0, %s89
      %s107 = sphi 0, %s107
      %s109 = sphi 0, %s107
      %s110 = sphi 0, %s109
      %s124 = sphi 0, %s110
      %s128 = sphi 0, %s128
      %s130 = sphi 0, %s128
      %s131 = sphi 0, %s130
      %s145 = sphi 0, %s131
      %s149 = sphi 0, %s149
      %s151 = sphi 0, %s149
      %s152 = sphi 0, %s151
      %s166 = sphi 0, %s152
      %s170 = sphi 0, %s170
      %s172 = sphi 0, %s170
      %s173 = sphi 0, %s172
      %s187 = sphi 0, %s173
      %s191 = sphi 0, %s191
      %s193 = sphi 0, %s191
      %s194 = sphi 0, %s193
      %s208 = sphi 0, %s194
      %s212 = sphi 0, %s212
      %s214 = sphi 0, %s212
      %s215 = sphi 0, %s214
      %s229 = sphi 0, %s215
      %s233 = sphi 0, %s233
      %s235 = sphi 0, %s233
      %s236 = sphi 0, %s235
      %s250 = sphi 0, %s236
      %s256 = sphi 0, %s258
      %s259 = sphi 0, %s256
      %s260 = sphi 0, %s259
      %s276 = sphi 0, %s260
    $region4: #{tpu_custom_call.1} parent=1 // loop_header_branch
      %20 = sbr.rel (%p18) target = $region8
    $region5: #{tpu_custom_call.1} parent=1 // loop_body
      %s22 = ssub.s32 %s17, 1
      %s23 = ssub.s32 %s17, 2
      %s30 = sadd.s32 1, %s25
      %p31 = scmp.ge.s32.totalorder %s30, 1
      %s32 = scalar_select %p31, 0, %s30
      %s33 = sadd.s32 1, %s24
      %s34 = scalar_select %p31, %s33, %s24
      %p35 = scmp.ge.s32.totalorder %s34, 2
      %s36 = scalar_select %p35, 0, %s34
      %s37 = ssub.s32 %s24, %s36
      %s38 = ssub.s32 %s25, %s32
      %s39 = sor.u32 %s37, %s38
      %p40 = scmp.eq.s32.totalorder %s39, 0
      %s42 = sadd.s32 %s41, 1
      %s43 = scalar_select %p40, %s41, %s42
      %p46 = pneg %p40
      %p47 = scmp.eq.s32.totalorder %s17, 1
      %p48 = por %p46, %p47
      %p49 = scmp.ne.s32.totalorder %s41, %s44
      %p50 = scmp.eq.s32.totalorder %s17, 0
      %p51 = por %p49, %p50
      %p52 = scmp.ne.s32.totalorder %s41, %s44
      %p53 = scmp.eq.s32.totalorder %s22, 1
      %p54 = por %p52, %p53
      %p55 = scmp.ne.s32.totalorder %s44, %s45
      %p56 = scmp.eq.s32.totalorder %s22, 0
      %p57 = por %p55, %p56
      %p58 = scmp.ne.s32.totalorder %s44, %s45
      %p59 = scmp.eq.s32.totalorder %s23, 1
      %p60 = por %p58, %p59
      %p62 = scmp.ne.s32.totalorder %s45, %s61
      %p63 = scmp.eq.s32.totalorder %s23, 0
      %p64 = por %p62, %p63
      %s66 = sadd.s32 %s65, 1
      %p69 = scmp.eq.s32.totalorder %s17, 1
      %p70 = scmp.ne.s32.totalorder %s65, %s67
      %p71 = scmp.eq.s32.totalorder %s17, 0
      %p72 = por %p70, %p71
      %p73 = scmp.ne.s32.totalorder %s65, %s67
      %p74 = scmp.eq.s32.totalorder %s22, 1
      %p75 = por %p73, %p74
      %p76 = scmp.ne.s32.totalorder %s67, %s68
      %p77 = scmp.eq.s32.totalorder %s22, 0
      %p78 = por %p76, %p77
      %p79 = scmp.ne.s32.totalorder %s67, %s68
      %p80 = scmp.eq.s32.totalorder %s23, 1
      %p81 = por %p79, %p80
      %p83 = scmp.ne.s32.totalorder %s68, %s82
      %p84 = scmp.eq.s32.totalorder %s23, 0
      %p85 = por %p83, %p84
      %s87 = sadd.s32 %s86, 1
      %p90 = scmp.eq.s32.totalorder %s17, 1
      %p91 = scmp.ne.s32.totalorder %s86, %s88
      %p92 = scmp.eq.s32.totalorder %s17, 0
      %p93 = por %p91, %p92
      %p94 = scmp.ne.s32.totalorder %s86, %s88
      %p95 = scmp.eq.s32.totalorder %s22, 1
      %p96 = por %p94, %p95
      %p97 = scmp.ne.s32.totalorder %s88, %s89
      %p98 = scmp.eq.s32.totalorder %s22, 0
      %p99 = por %p97, %p98
      %p100 = scmp.ne.s32.totalorder %s88, %s89
      %p101 = scmp.eq.s32.totalorder %s23, 1
      %p102 = por %p100, %p101
      %p104 = scmp.ne.s32.totalorder %s89, %s103
      %p105 = scmp.eq.s32.totalorder %s23, 0
      %p106 = por %p104, %p105
      %s108 = sadd.s32 %s107, 1
      %p111 = scmp.eq.s32.totalorder %s17, 1
      %p112 = scmp.ne.s32.totalorder %s107, %s109
      %p113 = scmp.eq.s32.totalorder %s17, 0
      %p114 = por %p112, %p113
      %p115 = scmp.ne.s32.totalorder %s107, %s109
      %p116 = scmp.eq.s32.totalorder %s22, 1
      %p117 = por %p115, %p116
      %p118 = scmp.ne.s32.totalorder %s109, %s110
      %p119 = scmp.eq.s32.totalorder %s22, 0
      %p120 = por %p118, %p119
      %p121 = scmp.ne.s32.totalorder %s109, %s110
      %p122 = scmp.eq.s32.totalorder %s23, 1
      %p123 = por %p121, %p122
      %p125 = scmp.ne.s32.totalorder %s110, %s124
      %p126 = scmp.eq.s32.totalorder %s23, 0
      %p127 = por %p125, %p126
      %s129 = sadd.s32 %s128, 1
      %p132 = scmp.eq.s32.totalorder %s17, 1
      %p133 = scmp.ne.s32.totalorder %s128, %s130
      %p134 = scmp.eq.s32.totalorder %s17, 0
      %p135 = por %p133, %p134
      %p136 = scmp.ne.s32.totalorder %s128, %s130
      %p137 = scmp.eq.s32.totalorder %s22, 1
      %p138 = por %p136, %p137
      %p139 = scmp.ne.s32.totalorder %s130, %s131
      %p140 = scmp.eq.s32.totalorder %s22, 0
      %p141 = por %p139, %p140
      %p142 = scmp.ne.s32.totalorder %s130, %s131
      %p143 = scmp.eq.s32.totalorder %s23, 1
      %p144 = por %p142, %p143
      %p146 = scmp.ne.s32.totalorder %s131, %s145
      %p147 = scmp.eq.s32.totalorder %s23, 0
      %p148 = por %p146, %p147
      %s150 = sadd.s32 %s149, 1
      %p153 = scmp.eq.s32.totalorder %s17, 1
      %p154 = scmp.ne.s32.totalorder %s149, %s151
      %p155 = scmp.eq.s32.totalorder %s17, 0
      %p156 = por %p154, %p155
      %p157 = scmp.ne.s32.totalorder %s149, %s151
      %p158 = scmp.eq.s32.totalorder %s22, 1
      %p159 = por %p157, %p158
      %p160 = scmp.ne.s32.totalorder %s151, %s152
      %p161 = scmp.eq.s32.totalorder %s22, 0
      %p162 = por %p160, %p161
      %p163 = scmp.ne.s32.totalorder %s151, %s152
      %p164 = scmp.eq.s32.totalorder %s23, 1
      %p165 = por %p163, %p164
      %p167 = scmp.ne.s32.totalorder %s152, %s166
      %p168 = scmp.eq.s32.totalorder %s23, 0
      %p169 = por %p167, %p168
      %s171 = sadd.s32 %s170, 1
      %p174 = scmp.eq.s32.totalorder %s17, 1
      %p175 = scmp.ne.s32.totalorder %s170, %s172
      %p176 = scmp.eq.s32.totalorder %s17, 0
      %p177 = por %p175, %p176
      %p178 = scmp.ne.s32.totalorder %s170, %s172
      %p179 = scmp.eq.s32.totalorder %s22, 1
      %p180 = por %p178, %p179
      %p181 = scmp.ne.s32.totalorder %s172, %s173
      %p182 = scmp.eq.s32.totalorder %s22, 0
      %p183 = por %p181, %p182
      %p184 = scmp.ne.s32.totalorder %s172, %s173
      %p185 = scmp.eq.s32.totalorder %s23, 1
      %p186 = por %p184, %p185
      %p188 = scmp.ne.s32.totalorder %s173, %s187
      %p189 = scmp.eq.s32.totalorder %s23, 0
      %p190 = por %p188, %p189
      %s192 = sadd.s32 %s191, 1
      %p195 = scmp.eq.s32.totalorder %s17, 1
      %p196 = scmp.ne.s32.totalorder %s191, %s193
      %p197 = scmp.eq.s32.totalorder %s17, 0
      %p198 = por %p196, %p197
      %p199 = scmp.ne.s32.totalorder %s191, %s193
      %p200 = scmp.eq.s32.totalorder %s22, 1
      %p201 = por %p199, %p200
      %p202 = scmp.ne.s32.totalorder %s193, %s194
      %p203 = scmp.eq.s32.totalorder %s22, 0
      %p204 = por %p202, %p203
      %p205 = scmp.ne.s32.totalorder %s193, %s194
      %p206 = scmp.eq.s32.totalorder %s23, 1
      %p207 = por %p205, %p206
      %p209 = scmp.ne.s32.totalorder %s194, %s208
      %p210 = scmp.eq.s32.totalorder %s23, 0
      %p211 = por %p209, %p210
      %s213 = sadd.s32 %s212, 1
      %p216 = scmp.eq.s32.totalorder %s17, 1
      %p217 = scmp.ne.s32.totalorder %s212, %s214
      %p218 = scmp.eq.s32.totalorder %s17, 0
      %p219 = por %p217, %p218
      %p220 = scmp.ne.s32.totalorder %s212, %s214
      %p221 = scmp.eq.s32.totalorder %s22, 1
      %p222 = por %p220, %p221
      %p223 = scmp.ne.s32.totalorder %s214, %s215
      %p224 = scmp.eq.s32.totalorder %s22, 0
      %p225 = por %p223, %p224
      %p226 = scmp.ne.s32.totalorder %s214, %s215
      %p227 = scmp.eq.s32.totalorder %s23, 1
      %p228 = por %p226, %p227
      %p230 = scmp.ne.s32.totalorder %s215, %s229
      %p231 = scmp.eq.s32.totalorder %s23, 0
      %p232 = por %p230, %p231
      %s234 = sadd.s32 %s233, 1
      %p237 = scmp.eq.s32.totalorder %s17, 1
      %p238 = scmp.ne.s32.totalorder %s233, %s235
      %p239 = scmp.eq.s32.totalorder %s17, 0
      %p240 = por %p238, %p239
      %p241 = scmp.ne.s32.totalorder %s233, %s235
      %p242 = scmp.eq.s32.totalorder %s22, 1
      %p243 = por %p241, %p242
      %p244 = scmp.ne.s32.totalorder %s235, %s236
      %p245 = scmp.eq.s32.totalorder %s22, 0
      %p246 = por %p244, %p245
      %p247 = scmp.ne.s32.totalorder %s235, %s236
      %p248 = scmp.eq.s32.totalorder %s23, 1
      %p249 = por %p247, %p248
      %p251 = scmp.ne.s32.totalorder %s236, %s250
      %p252 = scmp.eq.s32.totalorder %s23, 0
      %p253 = por %p251, %p252
      %s254 = ssub.s32 %s24, %s36
      %p255 = scmp.eq.s32.totalorder %s254, 0
      %s257 = sadd.s32 %s256, 1
      %s258 = scalar_select %p255, %s256, %s257
      %p261 = pneg %p255
      %p262 = scmp.eq.s32.totalorder %s17, 1
      %p263 = por %p261, %p262
      %p264 = scmp.ne.s32.totalorder %s256, %s259
      %p265 = scmp.eq.s32.totalorder %s17, 0
      %p266 = por %p264, %p265
      %p267 = scmp.ne.s32.totalorder %s256, %s259
      %p268 = scmp.eq.s32.totalorder %s22, 1
      %p269 = por %p267, %p268
      %p270 = scmp.ne.s32.totalorder %s259, %s260
      %p271 = scmp.eq.s32.totalorder %s22, 0
      %p272 = por %p270, %p271
      %p273 = scmp.ne.s32.totalorder %s259, %s260
      %p274 = scmp.eq.s32.totalorder %s23, 1
      %p275 = por %p273, %p274
      %p277 = scmp.ne.s32.totalorder %s260, %s276
      %p278 = scmp.eq.s32.totalorder %s23, 0
      %p279 = por %p277, %p278
      %p280 = scmp.le.s32.totalorder 1, %s17
      %p281 = scmp.lt.s32.totalorder %s17, 3
      %p282 = pnand %p280, %p281
      %p283 = pneg %p282
      // Predicated region
      $region9: #{tpu_custom_call.1} parent=5 // pred_check
        _
      $region10: #{tpu_custom_call.1} parent=5 // pred_check_branch
        %285 = sbr.rel (%p282) target = $region12
      $region11: #{tpu_custom_call.1} parent=5 // pred_region
        %s286 = ssub.s32 %s17, 1
        // Predicated region
        $region13: #{tpu_custom_call.1} parent=11 // pred_check
          %p287 = pneg %p78
        $region14: #{tpu_custom_call.1} parent=11 // pred_check_branch
          %289 = sbr.rel (%p287) target = $region16
        $region15: #{tpu_custom_call.1} parent=11 // pred_region
          _
        $region16: #{tpu_custom_call.1} parent=11 // pred_fallthru
          _
        // Predicated region
        $region17: #{tpu_custom_call.1} parent=11 // pred_check
          %p290 = pneg %p99
        $region18: #{tpu_custom_call.1} parent=11 // pred_check_branch
          %292 = sbr.rel (%p290) target = $region20
        $region19: #{tpu_custom_call.1} parent=11 // pred_region
          %s294 = ssub.s32 64, 64
          %295 = vsyncadd [#allocation5], %s294
          %s297 = sshll.u32 [#allocation4], 4
          %s298 = int_to_ptr.vmem [resolvable:$true] %s297
          %300 = dma.hbm_to_vmem [thread:$0]  %s2, 64, %s298, [#allocation5]
        $region20: #{tpu_custom_call.1} parent=11 // pred_fallthru
          _
        // Predicated region
        $region21: #{tpu_custom_call.1} parent=11 // pred_check
          %p301 = pneg %p120
        $region22: #{tpu_custom_call.1} parent=11 // pred_check_branch
          %303 = sbr.rel (%p301) target = $region24
        $region23: #{tpu_custom_call.1} parent=11 // pred_region
          _
        $region24: #{tpu_custom_call.1} parent=11 // pred_fallthru
          _
        // Predicated region
        $region25: #{tpu_custom_call.1} parent=11 // pred_check
          %p304 = pneg %p141
        $region26: #{tpu_custom_call.1} parent=11 // pred_check_branch
          %306 = sbr.rel (%p304) target = $region28
        $region27: #{tpu_custom_call.1} parent=11 // pred_region
          _
        $region28: #{tpu_custom_call.1} parent=11 // pred_fallthru
          _
        // Predicated region
        $region29: #{tpu_custom_call.1} parent=11 // pred_check
          %p307 = pneg %p162
        $region30: #{tpu_custom_call.1} parent=11 // pred_check_branch
          %309 = sbr.rel (%p307) target = $region32
        $region31: #{tpu_custom_call.1} parent=11 // pred_region
          _
        $region32: #{tpu_custom_call.1} parent=11 // pred_fallthru
          _
        // Predicated region
        $region33: #{tpu_custom_call.1} parent=11 // pred_check
          %p310 = pneg %p183
        $region34: #{tpu_custom_call.1} parent=11 // pred_check_branch
          %312 = sbr.rel (%p310) target = $region36
        $region35: #{tpu_custom_call.1} parent=11 // pred_region
          _
        $region36: #{tpu_custom_call.1} parent=11 // pred_fallthru
          _
        // Predicated region
        $region37: #{tpu_custom_call.1} parent=11 // pred_check
          %p313 = pneg %p204
        $region38: #{tpu_custom_call.1} parent=11 // pred_check_branch
          %315 = sbr.rel (%p313) target = $region40
        $region39: #{tpu_custom_call.1} parent=11 // pred_region
          _
        $region40: #{tpu_custom_call.1} parent=11 // pred_fallthru
          _
        // Predicated region
        $region41: #{tpu_custom_call.1} parent=11 // pred_check
          %p316 = pneg %p225
        $region42: #{tpu_custom_call.1} parent=11 // pred_check_branch
          %318 = sbr.rel (%p316) target = $region44
        $region43: #{tpu_custom_call.1} parent=11 // pred_region
          _
        $region44: #{tpu_custom_call.1} parent=11 // pred_fallthru
          _
        // Predicated region
        $region45: #{tpu_custom_call.1} parent=11 // pred_check
          %p319 = pneg %p246
        $region46: #{tpu_custom_call.1} parent=11 // pred_check_branch
          %321 = sbr.rel (%p319) target = $region48
        $region47: #{tpu_custom_call.1} parent=11 // pred_region
          _
        $region48: #{tpu_custom_call.1} parent=11 // pred_fallthru
          _
      $region12: #{tpu_custom_call.1} parent=5 // pred_fallthru
        _
      %p322 = scmp.lt.s32.totalorder %s17, 2
      // Predicated region
      $region49: #{tpu_custom_call.1} parent=5 // pred_check
        %p323 = pneg %p322
      $region50: #{tpu_custom_call.1} parent=5 // pred_check_branch
        %325 = sbr.rel (%p323) target = $region52
      $region51: #{tpu_custom_call.1} parent=5 // pred_region
        // Predicated region
        $region53: #{tpu_custom_call.1} parent=51 // pred_check
          %p326 = pneg %p51
        $region54: #{tpu_custom_call.1} parent=51 // pred_check_branch
          %328 = sbr.rel (%p326) target = $region56
        $region55: #{tpu_custom_call.1} parent=51 // pred_region
          %s329 = smul.u32 2, %s25
          %p330 = scmp.lt.s32.totalorder %s24, 1
          %s331 = scalar_select %p330, %s24, 1
          %p332 = scmp.lt.s32.totalorder %s329, 1
          %s333 = scalar_select %p332, %s329, 1
          %s334 = smul.addr %s331, 2
          %s335 = sadd.s32 %s333, %s334
          %s336 = smul.addr %s335, 4
          %s337 = scalar_lea.vmem %s0, %s336
          %s338 = smul.u32 2, %s25
        $region56: #{tpu_custom_call.1} parent=51 // pred_fallthru
          _
      $region52: #{tpu_custom_call.1} parent=5 // pred_fallthru
        _
      %p339 = scmp.le.s32.totalorder 1, %s17
      %p340 = scmp.lt.s32.totalorder %s17, 3
      %p341 = pnand %p339, %p340
      %p342 = pneg %p341
      // Predicated region
      $region57: #{tpu_custom_call.1} parent=5 // pred_check
        _
      $region58: #{tpu_custom_call.1} parent=5 // pred_check_branch
        %344 = sbr.rel (%p341) target = $region60
      $region59: #{tpu_custom_call.1} parent=5 // pred_region
        %s345 = ssub.s32 %s17, 1
        // Predicated region
        $region61: #{tpu_custom_call.1} parent=59 // pred_check
          %p346 = pneg %p99
        $region62: #{tpu_custom_call.1} parent=59 // pred_check_branch
          %348 = sbr.rel (%p346) target = $region64
        $region63: #{tpu_custom_call.1} parent=59 // pred_region
          %349 = dma.done [#allocation5], 64
        $region64: #{tpu_custom_call.1} parent=59 // pred_fallthru
          _
        %s350 = smul.u32 2, %s27
        %p351 = scmp.lt.s32.totalorder %s26, 1
        %s352 = scalar_select %p351, %s26, 1
        %p353 = scmp.lt.s32.totalorder %s350, 1
        %s354 = scalar_select %p353, %s350, 1
        %s355 = smul.addr %s352, 2
        %s356 = sadd.s32 %s354, %s355
        %s357 = smul.addr %s356, 4
        %s358 = scalar_lea.vmem %s0, %s357
        %p359 = pneg %p57
        %p360 = pneg %p54
        %p361 = pneg %p78
        %p362 = pneg %p75
        %p363 = pneg %p99
        %p364 = pneg %p96
        %p365 = pneg %p120
        %p366 = pneg %p117
        %p367 = pneg %p141
        %p368 = pneg %p138
        %p369 = pneg %p162
        %p370 = pneg %p159
        %p371 = pneg %p183
        %p372 = pneg %p180
        %p373 = pneg %p204
        %p374 = pneg %p201
        %p375 = pneg %p225
        %p376 = pneg %p222
        %p377 = pneg %p246
        %p378 = pneg %p243
        %p379 = pneg %p272
        %p380 = pneg %p269
        %p381 = scmp.lt.s32.totalorder %s26, 1
        %s382 = scalar_select %p381, %s26, 1
        %s383 = smul.addr %s382, 4
        %s384 = scalar_lea.vmem %s10, %s383
        %s385 = smul.u32 2, %s27
        %p386 = scmp.lt.s32.totalorder %s26, 1
        %s387 = scalar_select %p386, %s26, 1
        %p388 = scmp.lt.s32.totalorder %s385, 1
        %s389 = scalar_select %p388, %s385, 1
        %s390 = smul.addr %s387, 2
        %s391 = sadd.s32 %s389, %s390
        %s392 = smul.addr %s391, 4
        %s393 = scalar_lea.vmem %s0, %s392
        %s394 = smul.u32 2, %s27
        %p395 = scmp.lt.s32.totalorder %s26, 1
        %s396 = scalar_select %p395, %s26, 1
        %s397 = smul.addr %s396, 4
        %s398 = scalar_lea.vmem %s10, %s397
        %p399 = scmp.eq.s32.totalorder %s27, 0
        // Predicated region
        $region65: #{tpu_custom_call.1} parent=59 // pred_check
          %p400 = pneg %p399
        $region66: #{tpu_custom_call.1} parent=59 // pred_check_branch
          %402 = sbr.rel (%p400) target = $region68
        $region67: #{tpu_custom_call.1} parent=59 // pred_region
          %vm403 = vcmask 3072
          %404 = vst.msk [vmem:[#allocation2] sm:$0xf] %vm403, 0.0
          %405 = vst.msk [vmem:[#allocation3] sm:$0xf] %vm403, -inf
        $region68: #{tpu_custom_call.1} parent=59 // pred_fallthru
          _
        %v406 = vld [vmem:[%s393] sm:$0xff]
        %v407 = vld [vmem:[#allocation2] sm:$0xf]
        %v409 = vcombine.high %v406, %v406
        %vm411 = vcmask 1043456
        %v412 = vsel %vm411, %v406, 0.0
        %v413 = vsel %vm411, %v409, 0.0
        %v414 = vadd.f32 %v412, %v413
        %415 = vadd.xlane.f32.xlu0 %v414
        %v416 = vpop.xlane.xlu0 %415
        %v417 = vadd.f32 %v407, %v416
        %vm418 = vcmask 3072
        %419 = vst.msk [vmem:[#allocation2] sm:$0xf] %vm418, %v417
        %v420 = vsel %vm411, %v406, -inf
        %v421 = vsel %vm411, %v409, -inf
        %v422 = vmax.f32 %v420, %v421
        %423 = vmax.xlane.f32.xlu0 %v422
        %v424 = vpop.xlane.xlu0 %423
        %v425 = vld [vmem:[#allocation3] sm:$0xf]
        %v426 = vmax.f32 %v425, %v424
        %427 = vst.msk [vmem:[#allocation3] sm:$0xf] %vm418, %v426
        // Predicated region
        $region69: #{tpu_custom_call.1} parent=59 // pred_check
          %p428 = pneg %p399
        $region70: #{tpu_custom_call.1} parent=59 // pred_check_branch
          %430 = sbr.rel (%p428) target = $region72
        $region71: #{tpu_custom_call.1} parent=59 // pred_region
          %v431 = vld [vmem:[#allocation2] sm:$0xf]
          %v432 = vmul.f32 %v431, 0.00390625
          %v433 = vld [vmem:[#allocation3] sm:$0xf]
          %v434 = vld [vmem:[%s1] sm:$0xf]
          %v435 = vld [vmem:[#allocation4] sm:$0xf]
          %vm436 = vcmask 31744
          %v438 = vsel %vm436, %v435, 0
          %v441 = vsel %vm411, %v433, 0
          %443 = vmatprep.subr.mxu0 0.0
          %444 = vmatpush1.msra.mxu0 0.0
          %445 = vmatprep.subr.mxu0 0.0
          %446 = vmatpush1.msra.mxu0 0.0
          %447 = vmatprep.subr.mxu0 0.0
          %448 = vmatpush1.msra.mxu0 0.0
          %449 = vmatprep.subr.mxu0 0.0
          %450 = vmatpush1.msra.mxu0 0.0
          %451 = vmatprep.subr.mxu0 0.0
          %452 = vmatpush1.msra.mxu0 0.0
          %453 = vmatprep.subr.mxu0 0.0
          %454 = vmatpush1.msra.mxu0 0.0
          %455 = vmatprep.subr.mxu0 0.0
          %456 = vmatpush1.msra.mxu0 0.0
          %457 = vmatprep.subr.mxu0 0.0
          %458 = vmatpush1.msra.mxu0 0.0
          %459 = vmatprep.subr.mxu0 0.0
          %460 = vmatpush1.msra.mxu0 0.0
          %461 = vmatprep.subr.mxu0 0.0
          %462 = vmatpush1.msra.mxu0 0.0
          %463 = vmatprep.subr.mxu0 0.0
          %464 = vmatpush1.msra.mxu0 0.0
          %465 = vmatprep.subr.mxu0 0.0
          %466 = vmatpush1.msra.mxu0 0.0
          %467 = vmatprep.subr.mxu0 0.0
          %468 = vmatpush1.msra.mxu0 0.0
          %469 = vmatprep.subr.mxu0 0.0
          %470 = vmatpush1.msra.mxu0 0.0
          %471 = vmatprep.subr.mxu0 0.0
          %472 = vmatpush1.msra.mxu0 0.0
          %473 = vmatprep.subr.mxu0 0.0
          %474 = vmatpush1.msra.mxu0 %v441
          %475 = vmatprep.subr.mxu0 0.0
          %476 = vmatpush2.msra.mxu0 0.0
          %477 = vmatprep.subr.mxu0 0.0
          %478 = vmatpush2.msra.mxu0 0.0
          %479 = vmatprep.subr.mxu0 0.0
          %480 = vmatpush2.msra.mxu0 0.0
          %481 = vmatprep.subr.mxu0 0.0
          %482 = vmatpush2.msra.mxu0 0.0
          %483 = vmatprep.subr.mxu0 0.0
          %484 = vmatpush2.msra.mxu0 0.0
          %485 = vmatprep.subr.mxu0 0.0
          %486 = vmatpush2.msra.mxu0 0.0
          %487 = vmatprep.subr.mxu0 0.0
          %488 = vmatpush2.msra.mxu0 0.0
          %489 = vmatprep.subr.mxu0 0.0
          %490 = vmatpush2.msra.mxu0 0.0
          %491 = vmatprep.subr.mxu0 0.0
          %492 = vmatpush2.msra.mxu0 0.0
          %493 = vmatprep.subr.mxu0 0.0
          %494 = vmatpush2.msra.mxu0 0.0
          %495 = vmatprep.subr.mxu0 0.0
          %496 = vmatpush2.msra.mxu0 0.0
          %497 = vmatprep.subr.mxu0 0.0
          %498 = vmatpush2.msra.mxu0 0.0
          %499 = vmatprep.subr.mxu0 0.0
          %500 = vmatpush2.msra.mxu0 0.0
          %501 = vmatprep.subr.mxu0 0.0
          %502 = vmatpush2.msra.mxu0 0.0
          %503 = vmatprep.subr.mxu0 0.0
          %504 = vmatpush2.msra.mxu0 0.0
          %505 = vmatprep.subr.mxu0 0.0
          %506 = vmatpush2.msra.mxu0 0.0
          %507 = vmatprep.mubr.f32.mxu0 0.0
          %508 = vmatmul.mubr.f32.gmra.mxu0 %v438
          %v509 = vpop.f32.mrf.mxu0
          %v510 = vadd.f32 0.0, %v509
          %v511 = vpop.f32.mrf.mxu0
          %512 = vdwg.mxu0
          %v514 = vsel %vm436, %v434, 0
          %v517 = vsel %vm411, %v432, 0
          %519 = vmatprep.subr.mxu0 0.0
          %520 = vmatpush1.msra.mxu0 0.0
          %521 = vmatprep.subr.mxu0 0.0
          %522 = vmatpush1.msra.mxu0 0.0
          %523 = vmatprep.subr.mxu0 0.0
          %524 = vmatpush1.msra.mxu0 0.0
          %525 = vmatprep.subr.mxu0 0.0
          %526 = vmatpush1.msra.mxu0 0.0
          %527 = vmatprep.subr.mxu0 0.0
          %528 = vmatpush1.msra.mxu0 0.0
          %529 = vmatprep.subr.mxu0 0.0
          %530 = vmatpush1.msra.mxu0 0.0
          %531 = vmatprep.subr.mxu0 0.0
          %532 = vmatpush1.msra.mxu0 0.0
          %533 = vmatprep.subr.mxu0 0.0
          %534 = vmatpush1.msra.mxu0 0.0
          %535 = vmatprep.subr.mxu0 0.0
          %536 = vmatpush1.msra.mxu0 0.0
          %537 = vmatprep.subr.mxu0 0.0
          %538 = vmatpush1.msra.mxu0 0.0
          %539 = vmatprep.subr.mxu0 0.0
          %540 = vmatpush1.msra.mxu0 0.0
          %541 = vmatprep.subr.mxu0 0.0
          %542 = vmatpush1.msra.mxu0 0.0
          %543 = vmatprep.subr.mxu0 0.0
          %544 = vmatpush1.msra.mxu0 0.0
          %545 = vmatprep.subr.mxu0 0.0
          %546 = vmatpush1.msra.mxu0 0.0
          %547 = vmatprep.subr.mxu0 0.0
          %548 = vmatpush1.msra.mxu0 0.0
          %549 = vmatprep.subr.mxu0 0.0
          %550 = vmatpush1.msra.mxu0 %v517
          %551 = vmatprep.subr.mxu0 0.0
          %552 = vmatpush2.msra.mxu0 0.0
          %553 = vmatprep.subr.mxu0 0.0
          %554 = vmatpush2.msra.mxu0 0.0
          %555 = vmatprep.subr.mxu0 0.0
          %556 = vmatpush2.msra.mxu0 0.0
          %557 = vmatprep.subr.mxu0 0.0
          %558 = vmatpush2.msra.mxu0 0.0
          %559 = vmatprep.subr.mxu0 0.0
          %560 = vmatpush2.msra.mxu0 0.0
          %561 = vmatprep.subr.mxu0 0.0
          %562 = vmatpush2.msra.mxu0 0.0
          %563 = vmatprep.subr.mxu0 0.0
          %564 = vmatpush2.msra.mxu0 0.0
          %565 = vmatprep.subr.mxu0 0.0
          %566 = vmatpush2.msra.mxu0 0.0
          %567 = vmatprep.subr.mxu0 0.0
          %568 = vmatpush2.msra.mxu0 0.0
          %569 = vmatprep.subr.mxu0 0.0
          %570 = vmatpush2.msra.mxu0 0.0
          %571 = vmatprep.subr.mxu0 0.0
          %572 = vmatpush2.msra.mxu0 0.0
          %573 = vmatprep.subr.mxu0 0.0
          %574 = vmatpush2.msra.mxu0 0.0
          %575 = vmatprep.subr.mxu0 0.0
          %576 = vmatpush2.msra.mxu0 0.0
          %577 = vmatprep.subr.mxu0 0.0
          %578 = vmatpush2.msra.mxu0 0.0
          %579 = vmatprep.subr.mxu0 0.0
          %580 = vmatpush2.msra.mxu0 0.0
          %581 = vmatprep.subr.mxu0 0.0
          %582 = vmatpush2.msra.mxu0 0.0
          %583 = vmatprep.mubr.f32.mxu0 0.0
          %584 = vmatmul.mubr.f32.gmra.mxu0 %v514
          %v585 = vpop.f32.mrf.mxu0
          %v586 = vadd.f32 %v510, %v585
          %v587 = vpop.f32.mrf.mxu0
          %588 = vdwg.mxu0
          %v589 = vld [vmem:[%s3] sm:$0xf]
          %v590 = vadd.f32 %v586, %v589
          %v591 = vld [vmem:[%s4] sm:$0x3]
          %v592 = vld [vmem:[%s5] sm:$0x3]
          %v594 = vsel %vm436, %v592, 0
          %596 = vmatprep.subr.mxu0 0.0
          %597 = vmatpush1.msra.mxu0 0.0
          %598 = vmatprep.subr.mxu0 0.0
          %599 = vmatpush1.msra.mxu0 0.0
          %600 = vmatprep.subr.mxu0 0.0
          %601 = vmatpush1.msra.mxu0 0.0
          %602 = vmatprep.subr.mxu0 0.0
          %603 = vmatpush1.msra.mxu0 0.0
          %604 = vmatprep.subr.mxu0 0.0
          %605 = vmatpush1.msra.mxu0 0.0
          %606 = vmatprep.subr.mxu0 0.0
          %607 = vmatpush1.msra.mxu0 0.0
          %608 = vmatprep.subr.mxu0 0.0
          %609 = vmatpush1.msra.mxu0 0.0
          %610 = vmatprep.subr.mxu0 0.0
          %611 = vmatpush1.msra.mxu0 0.0
          %612 = vmatprep.subr.mxu0 0.0
          %613 = vmatpush1.msra.mxu0 0.0
          %614 = vmatprep.subr.mxu0 0.0
          %615 = vmatpush1.msra.mxu0 0.0
          %616 = vmatprep.subr.mxu0 0.0
          %617 = vmatpush1.msra.mxu0 0.0
          %618 = vmatprep.subr.mxu0 0.0
          %619 = vmatpush1.msra.mxu0 0.0
          %620 = vmatprep.subr.mxu0 0.0
          %621 = vmatpush1.msra.mxu0 0.0
          %622 = vmatprep.subr.mxu0 0.0
          %623 = vmatpush1.msra.mxu0 0.0
          %624 = vmatprep.subr.mxu0 0.0
          %625 = vmatpush1.msra.mxu0 0.0
          %626 = vmatprep.subr.mxu0 0.0
          %627 = vmatpush1.msra.mxu0 %v441
          %628 = vmatprep.subr.mxu0 0.0
          %629 = vmatpush2.msra.mxu0 0.0
          %630 = vmatprep.subr.mxu0 0.0
          %631 = vmatpush2.msra.mxu0 0.0
          %632 = vmatprep.subr.mxu0 0.0
          %633 = vmatpush2.msra.mxu0 0.0
          %634 = vmatprep.subr.mxu0 0.0
          %635 = vmatpush2.msra.mxu0 0.0
          %636 = vmatprep.subr.mxu0 0.0
          %637 = vmatpush2.msra.mxu0 0.0
          %638 = vmatprep.subr.mxu0 0.0
          %639 = vmatpush2.msra.mxu0 0.0
          %640 = vmatprep.subr.mxu0 0.0
          %641 = vmatpush2.msra.mxu0 0.0
          %642 = vmatprep.subr.mxu0 0.0
          %643 = vmatpush2.msra.mxu0 0.0
          %644 = vmatprep.subr.mxu0 0.0
          %645 = vmatpush2.msra.mxu0 0.0
          %646 = vmatprep.subr.mxu0 0.0
          %647 = vmatpush2.msra.mxu0 0.0
          %648 = vmatprep.subr.mxu0 0.0
          %649 = vmatpush2.msra.mxu0 0.0
          %650 = vmatprep.subr.mxu0 0.0
          %651 = vmatpush2.msra.mxu0 0.0
          %652 = vmatprep.subr.mxu0 0.0
          %653 = vmatpush2.msra.mxu0 0.0
          %654 = vmatprep.subr.mxu0 0.0
          %655 = vmatpush2.msra.mxu0 0.0
          %656 = vmatprep.subr.mxu0 0.0
          %657 = vmatpush2.msra.mxu0 0.0
          %658 = vmatprep.subr.mxu0 0.0
          %659 = vmatpush2.msra.mxu0 0.0
          %660 = vmatprep.mubr.f32.mxu0 0.0
          %661 = vmatmul.mubr.f32.gmra.mxu0 %v594
          %v662 = vpop.f32.mrf.mxu0
          %v663 = vadd.f32 0.0, %v662
          %v664 = vpop.f32.mrf.mxu0
          %665 = vdwg.mxu0
          %v667 = vsel %vm436, %v591, 0
          %669 = vmatprep.subr.mxu0 0.0
          %670 = vmatpush1.msra.mxu0 0.0
          %671 = vmatprep.subr.mxu0 0.0
          %672 = vmatpush1.msra.mxu0 0.0
          %673 = vmatprep.subr.mxu0 0.0
          %674 = vmatpush1.msra.mxu0 0.0
          %675 = vmatprep.subr.mxu0 0.0
          %676 = vmatpush1.msra.mxu0 0.0
          %677 = vmatprep.subr.mxu0 0.0
          %678 = vmatpush1.msra.mxu0 0.0
          %679 = vmatprep.subr.mxu0 0.0
          %680 = vmatpush1.msra.mxu0 0.0
          %681 = vmatprep.subr.mxu0 0.0
          %682 = vmatpush1.msra.mxu0 0.0
          %683 = vmatprep.subr.mxu0 0.0
          %684 = vmatpush1.msra.mxu0 0.0
          %685 = vmatprep.subr.mxu0 0.0
          %686 = vmatpush1.msra.mxu0 0.0
          %687 = vmatprep.subr.mxu0 0.0
          %688 = vmatpush1.msra.mxu0 0.0
          %689 = vmatprep.subr.mxu0 0.0
          %690 = vmatpush1.msra.mxu0 0.0
          %691 = vmatprep.subr.mxu0 0.0
          %692 = vmatpush1.msra.mxu0 0.0
          %693 = vmatprep.subr.mxu0 0.0
          %694 = vmatpush1.msra.mxu0 0.0
          %695 = vmatprep.subr.mxu0 0.0
          %696 = vmatpush1.msra.mxu0 0.0
          %697 = vmatprep.subr.mxu0 0.0
          %698 = vmatpush1.msra.mxu0 0.0
          %699 = vmatprep.subr.mxu0 0.0
          %700 = vmatpush1.msra.mxu0 %v517
          %701 = vmatprep.subr.mxu0 0.0
          %702 = vmatpush2.msra.mxu0 0.0
          %703 = vmatprep.subr.mxu0 0.0
          %704 = vmatpush2.msra.mxu0 0.0
          %705 = vmatprep.subr.mxu0 0.0
          %706 = vmatpush2.msra.mxu0 0.0
          %707 = vmatprep.subr.mxu0 0.0
          %708 = vmatpush2.msra.mxu0 0.0
          %709 = vmatprep.subr.mxu0 0.0
          %710 = vmatpush2.msra.mxu0 0.0
          %711 = vmatprep.subr.mxu0 0.0
          %712 = vmatpush2.msra.mxu0 0.0
          %713 = vmatprep.subr.mxu0 0.0
          %714 = vmatpush2.msra.mxu0 0.0
          %715 = vmatprep.subr.mxu0 0.0
          %716 = vmatpush2.msra.mxu0 0.0
          %717 = vmatprep.subr.mxu0 0.0
          %718 = vmatpush2.msra.mxu0 0.0
          %719 = vmatprep.subr.mxu0 0.0
          %720 = vmatpush2.msra.mxu0 0.0
          %721 = vmatprep.subr.mxu0 0.0
          %722 = vmatpush2.msra.mxu0 0.0
          %723 = vmatprep.subr.mxu0 0.0
          %724 = vmatpush2.msra.mxu0 0.0
          %725 = vmatprep.subr.mxu0 0.0
          %726 = vmatpush2.msra.mxu0 0.0
          %727 = vmatprep.subr.mxu0 0.0
          %728 = vmatpush2.msra.mxu0 0.0
          %729 = vmatprep.subr.mxu0 0.0
          %730 = vmatpush2.msra.mxu0 0.0
          %731 = vmatprep.subr.mxu0 0.0
          %732 = vmatpush2.msra.mxu0 0.0
          %733 = vmatprep.mubr.f32.mxu0 0.0
          %734 = vmatmul.mubr.f32.gmra.mxu0 %v667
          %v735 = vpop.f32.mrf.mxu0
          %v736 = vadd.f32 %v663, %v735
          %v737 = vpop.f32.mrf.mxu0
          %738 = vdwg.mxu0
          %v739 = vld [vmem:[%s6] sm:$0x3]
          %v741 = vsel %vm436, %v739, 0
          %v744 = vsel %vm411, %v590, 0
          %746 = vmatprep.subr.mxu0 0.0
          %747 = vmatpush1.msra.mxu0 0.0
          %748 = vmatprep.subr.mxu0 0.0
          %749 = vmatpush1.msra.mxu0 0.0
          %750 = vmatprep.subr.mxu0 0.0
          %751 = vmatpush1.msra.mxu0 0.0
          %752 = vmatprep.subr.mxu0 0.0
          %753 = vmatpush1.msra.mxu0 0.0
          %754 = vmatprep.subr.mxu0 0.0
          %755 = vmatpush1.msra.mxu0 0.0
          %756 = vmatprep.subr.mxu0 0.0
          %757 = vmatpush1.msra.mxu0 0.0
          %758 = vmatprep.subr.mxu0 0.0
          %759 = vmatpush1.msra.mxu0 0.0
          %760 = vmatprep.subr.mxu0 0.0
          %761 = vmatpush1.msra.mxu0 0.0
          %762 = vmatprep.subr.mxu0 0.0
          %763 = vmatpush1.msra.mxu0 0.0
          %764 = vmatprep.subr.mxu0 0.0
          %765 = vmatpush1.msra.mxu0 0.0
          %766 = vmatprep.subr.mxu0 0.0
          %767 = vmatpush1.msra.mxu0 0.0
          %768 = vmatprep.subr.mxu0 0.0
          %769 = vmatpush1.msra.mxu0 0.0
          %770 = vmatprep.subr.mxu0 0.0
          %771 = vmatpush1.msra.mxu0 0.0
          %772 = vmatprep.subr.mxu0 0.0
          %773 = vmatpush1.msra.mxu0 0.0
          %774 = vmatprep.subr.mxu0 0.0
          %775 = vmatpush1.msra.mxu0 0.0
          %776 = vmatprep.subr.mxu0 0.0
          %777 = vmatpush1.msra.mxu0 %v744
          %778 = vmatprep.subr.mxu0 0.0
          %779 = vmatpush2.msra.mxu0 0.0
          %780 = vmatprep.subr.mxu0 0.0
          %781 = vmatpush2.msra.mxu0 0.0
          %782 = vmatprep.subr.mxu0 0.0
          %783 = vmatpush2.msra.mxu0 0.0
          %784 = vmatprep.subr.mxu0 0.0
          %785 = vmatpush2.msra.mxu0 0.0
          %786 = vmatprep.subr.mxu0 0.0
          %787 = vmatpush2.msra.mxu0 0.0
          %788 = vmatprep.subr.mxu0 0.0
          %789 = vmatpush2.msra.mxu0 0.0
          %790 = vmatprep.subr.mxu0 0.0
          %791 = vmatpush2.msra.mxu0 0.0
          %792 = vmatprep.subr.mxu0 0.0
          %793 = vmatpush2.msra.mxu0 0.0
          %794 = vmatprep.subr.mxu0 0.0
          %795 = vmatpush2.msra.mxu0 0.0
          %796 = vmatprep.subr.mxu0 0.0
          %797 = vmatpush2.msra.mxu0 0.0
          %798 = vmatprep.subr.mxu0 0.0
          %799 = vmatpush2.msra.mxu0 0.0
          %800 = vmatprep.subr.mxu0 0.0
          %801 = vmatpush2.msra.mxu0 0.0
          %802 = vmatprep.subr.mxu0 0.0
          %803 = vmatpush2.msra.mxu0 0.0
          %804 = vmatprep.subr.mxu0 0.0
          %805 = vmatpush2.msra.mxu0 0.0
          %806 = vmatprep.subr.mxu0 0.0
          %807 = vmatpush2.msra.mxu0 0.0
          %808 = vmatprep.subr.mxu0 0.0
          %809 = vmatpush2.msra.mxu0 0.0
          %810 = vmatprep.mubr.f32.mxu0 0.0
          %811 = vmatmul.mubr.f32.gmra.mxu0 %v741
          %v812 = vpop.f32.mrf.mxu0
          %v813 = vadd.f32 0.0, %v812
          %v814 = vpop.f32.mrf.mxu0
          %815 = vdwg.mxu0
          %v816 = vadd.f32 %v736, %v813
          %v817 = vld [vmem:[%s7] sm:$0x3]
          %v818 = vadd.f32 %v816, %v817
          %v819 = vld [vmem:[%s8] sm:$0xf]
          %v820 = vld [vmem:[%s9] sm:$0xf]
          %vm821 = vcmask 15360
          %v823 = vsel %vm821, %v819, 0
          %vm825 = vcmask 1041408
          %v827 = vsel %vm825, %v818, 0
          %829 = vmatprep.subr.mxu0 0.0
          %830 = vmatpush1.msra.mxu0 0.0
          %831 = vmatprep.subr.mxu0 0.0
          %832 = vmatpush1.msra.mxu0 0.0
          %833 = vmatprep.subr.mxu0 0.0
          %834 = vmatpush1.msra.mxu0 0.0
          %835 = vmatprep.subr.mxu0 0.0
          %836 = vmatpush1.msra.mxu0 0.0
          %837 = vmatprep.subr.mxu0 0.0
          %838 = vmatpush1.msra.mxu0 0.0
          %839 = vmatprep.subr.mxu0 0.0
          %840 = vmatpush1.msra.mxu0 0.0
          %841 = vmatprep.subr.mxu0 0.0
          %842 = vmatpush1.msra.mxu0 0.0
          %843 = vmatprep.subr.mxu0 0.0
          %844 = vmatpush1.msra.mxu0 0.0
          %845 = vmatprep.subr.mxu0 0.0
          %846 = vmatpush1.msra.mxu0 0.0
          %847 = vmatprep.subr.mxu0 0.0
          %848 = vmatpush1.msra.mxu0 0.0
          %849 = vmatprep.subr.mxu0 0.0
          %850 = vmatpush1.msra.mxu0 0.0
          %851 = vmatprep.subr.mxu0 0.0
          %852 = vmatpush1.msra.mxu0 0.0
          %853 = vmatprep.subr.mxu0 0.0
          %854 = vmatpush1.msra.mxu0 0.0
          %855 = vmatprep.subr.mxu0 0.0
          %856 = vmatpush1.msra.mxu0 0.0
          %857 = vmatprep.subr.mxu0 0.0
          %858 = vmatpush1.msra.mxu0 0.0
          %859 = vmatprep.subr.mxu0 0.0
          %860 = vmatpush1.msra.mxu0 %v827
          %861 = vmatprep.subr.mxu0 0.0
          %862 = vmatpush2.msra.mxu0 0.0
          %863 = vmatprep.subr.mxu0 0.0
          %864 = vmatpush2.msra.mxu0 0.0
          %865 = vmatprep.subr.mxu0 0.0
          %866 = vmatpush2.msra.mxu0 0.0
          %867 = vmatprep.subr.mxu0 0.0
          %868 = vmatpush2.msra.mxu0 0.0
          %869 = vmatprep.subr.mxu0 0.0
          %870 = vmatpush2.msra.mxu0 0.0
          %871 = vmatprep.subr.mxu0 0.0
          %872 = vmatpush2.msra.mxu0 0.0
          %873 = vmatprep.subr.mxu0 0.0
          %874 = vmatpush2.msra.mxu0 0.0
          %875 = vmatprep.subr.mxu0 0.0
          %876 = vmatpush2.msra.mxu0 0.0
          %877 = vmatprep.subr.mxu0 0.0
          %878 = vmatpush2.msra.mxu0 0.0
          %879 = vmatprep.subr.mxu0 0.0
          %880 = vmatpush2.msra.mxu0 0.0
          %881 = vmatprep.subr.mxu0 0.0
          %882 = vmatpush2.msra.mxu0 0.0
          %883 = vmatprep.subr.mxu0 0.0
          %884 = vmatpush2.msra.mxu0 0.0
          %885 = vmatprep.subr.mxu0 0.0
          %886 = vmatpush2.msra.mxu0 0.0
          %887 = vmatprep.subr.mxu0 0.0
          %888 = vmatpush2.msra.mxu0 0.0
          %889 = vmatprep.subr.mxu0 0.0
          %890 = vmatpush2.msra.mxu0 0.0
          %891 = vmatprep.subr.mxu0 0.0
          %892 = vmatpush2.msra.mxu0 0.0
          %893 = vmatprep.mubr.f32.mxu0 0.0
          %894 = vmatmul.mubr.f32.gmra.mxu0 %v823
          %v895 = vpop.f32.mrf.mxu0
          %v896 = vadd.f32 %v820, %v895
          %v897 = vpop.f32.mrf.mxu0
          %898 = vdwg.mxu0
          %v899 = vsel %vm418, %v896, -inf
          %v900 = vrot.slane %v899, 4
          %v901 = vmax.f32 %v899, %v900
          %v902 = vrot.slane %v901, 2
          %v903 = vmax.f32 %v901, %v902
          %v904 = vrot.slane %v903, 1
          %v905 = vmax.f32 %v903, %v904
          %v906 = vsub.f32 %v896, %v905
          %v907 = vmul.f32 %v906, 1.442695
          %v908 = vpow.pop %v907
          %v909 = vsel %vm418, %v908, 0.0
          %v910 = vrot.slane %v909, 4
          %v911 = vadd.f32 %v909, %v910
          %v912 = vrot.slane %v911, 2
          %v913 = vadd.f32 %v911, %v912
          %v914 = vrot.slane %v913, 1
          %v915 = vadd.f32 %v913, %v914
          %v916 = vrcp.pop %v915
          %v917 = vmul.f32 %v908, %v916
          %v918 = vmul.f32 %v917, %v432
          %v919 = vadd.f32 %v918, %v433
          %920 = vst.msk [vmem:[%s398] sm:$0xf] %vm418, %v919
        $region72: #{tpu_custom_call.1} parent=59 // pred_fallthru
          _
        %p921 = scmp.lt.s32.totalorder %s26, 1
        %s922 = scalar_select %p921, %s26, 1
        %s923 = smul.addr %s922, 4
        %s924 = scalar_lea.vmem %s10, %s923
        // Predicated region
        $region73: #{tpu_custom_call.1} parent=59 // pred_check
          %p925 = pneg %p269
        $region74: #{tpu_custom_call.1} parent=59 // pred_check_branch
          %927 = sbr.rel (%p925) target = $region76
        $region75: #{tpu_custom_call.1} parent=59 // pred_region
          _
        $region76: #{tpu_custom_call.1} parent=59 // pred_fallthru
          _
      $region60: #{tpu_custom_call.1} parent=5 // pred_fallthru
        _
      %p928 = scmp.le.s32.totalorder 2, %s17
      // Predicated region
      $region77: #{tpu_custom_call.1} parent=5 // pred_check
        %p929 = pneg %p928
      $region78: #{tpu_custom_call.1} parent=5 // pred_check_branch
        %931 = sbr.rel (%p929) target = $region80
      $region79: #{tpu_custom_call.1} parent=5 // pred_region
        %s932 = ssub.s32 %s17, 2
        // Predicated region
        $region81: #{tpu_custom_call.1} parent=79 // pred_check
          %p933 = pneg %p275
        $region82: #{tpu_custom_call.1} parent=79 // pred_check_branch
          %935 = sbr.rel (%p933) target = $region84
        $region83: #{tpu_custom_call.1} parent=79 // pred_region
          %p936 = scmp.lt.s32.totalorder %s28, 1
          %s937 = scalar_select %p936, %s28, 1
          %s938 = smul.addr %s937, 4
          %s939 = scalar_lea.vmem %s10, %s938
        $region84: #{tpu_custom_call.1} parent=79 // pred_fallthru
          _
      $region80: #{tpu_custom_call.1} parent=5 // pred_fallthru
        _
    $region6: #{tpu_custom_call.1} parent=1 // loop_footer
      %s21 = sadd.s32 1, %s17
    $region7: #{tpu_custom_call.1} parent=1 // loop_footer_branch
      %16 = sbr.rel target = $region3
    $region8: #{tpu_custom_call.1} parent=1 // loop_exit
      _
    %940 = vsyncpa [#allocation5], 1
    %s941 = scalar_lea.sflag [#allocation5], 1
    %942 = vsyncpa %s941, 1

</llo_original>
